<compile_context>
chip_gen: v5e
topology: v5e:2x2
jax: 0.10.0
libtpu: 0.0.40
codegen_flags: <defaults>
</compile_context>

<pallas_src>
from itertools import accumulate

import numpy as np
import jax
import jax.numpy as jnp
from jax.experimental import pallas as pl
from jax.experimental.pallas import tpu as pltpu


def _round_up(x, m):
    return ((x + m - 1) // m) * m


# ----------------------------------------------------------------------------
# Resampling-matrix builder (numpy glue, built once per sensor at __init__).
# ----------------------------------------------------------------------------
def _linear_interp_matrix(l_in, l_out, l_out_pad):
    """(l_in, l_out_pad) matrix matching F.interpolate(mode='linear',
    align_corners=False).  Columns >= l_out are zero (lane padding so the MXU
    N dim and the output stores are 128-aligned)."""
    # TODO(synk): for very long windows replace this dense matrix (2 nnz/column)
    # with a gather + lerp VPU formulation to avoid O(L_in*L_out) MXU work.
    j = np.arange(l_out, dtype=np.int64)
    scale = float(l_in) / float(l_out)
    src = scale * (j.astype(np.float64) + 0.5) - 0.5
    src = np.maximum(src, 0.0)
    i0 = np.minimum(np.floor(src).astype(np.int64), l_in - 1)
    i1 = np.minimum(i0 + 1, l_in - 1)
    w1 = np.clip(src - i0, 0.0, 1.0)
    w0 = 1.0 - w1
    mat = np.zeros((l_in, l_out_pad), dtype=np.float32)
    mat[i0, j] += w0.astype(np.float32)
    mat[i1, j] += w1.astype(np.float32)
    return mat


# ----------------------------------------------------------------------------
# Fused kernel bodies.  `sensor_meta` is a static tuple of
# (channel_offset, C_sensor, L_sensor, L_effective) so the code fully unrolls.
# ----------------------------------------------------------------------------
def _make_linear_kernel(sensor_meta, l_out_pad, batch_tile, compute_dtype):
    n_sensors = len(sensor_meta)

    def kernel(*refs):
        x_refs = refs[:n_sensors]                # (tb, C_s, L_s) each, HBM dtype
        m_refs = refs[n_sensors:2 * n_sensors]   # (L_s, L_out_pad) each, VMEM-resident
        o_ref = refs[2 * n_sensors]              # (tb, C_total, L_out_pad)
        for (c_off, c_s, l_s, _), x_ref, m_ref in zip(sensor_meta, x_refs, m_refs):
            # Collapse (tb, C_s) into the M dim of a single MXU matmul.
            x2 = x_ref[...].reshape(batch_tile * c_s, l_s)
            if x2.dtype != compute_dtype:
                # In-kernel cast (VPU) — no extra wrapper-side HBM pass.
                x2 = x2.astype(compute_dtype)
            y = jnp.dot(x2, m_ref[...], preferred_element_type=jnp.float32)
            # ONE lane-dense store per sensor into its channel slice (no
            # per-batch-row scatter).
            o_ref[:, c_off:c_off + c_s, :] = (
                y.reshape(batch_tile, c_s, l_out_pad).astype(o_ref.dtype))

    return kernel


def _make_zeropad_kernel(sensor_meta, l_out_pad):
    n_sensors = len(sensor_meta)

    def kernel(*refs):
        x_refs = refs[:n_sensors]   # (tb, C_s, L_eff) each
        o_ref = refs[n_sensors]     # (tb, C_total, L_out_pad)
        for (c_off, c_s, _l_s, l_eff), x_ref in zip(sensor_meta, x_refs):
            x = x_ref[...].astype(o_ref.dtype)
            if l_eff == l_out_pad:
                # Truncate case: the discarded tail was never DMA'd; one store.
                o_ref[:, c_off:c_off + c_s, :] = x
            else:
                # Pad case: fuse data + zeros into a single lane-dense store.
                zeros = jnp.zeros((x.shape[0], c_s, l_out_pad - l_eff), o_ref.dtype)
                o_ref[:, c_off:c_off + c_s, :] = jnp.concatenate([x, zeros], axis=-1)

    return kernel


# ----------------------------------------------------------------------------
# Module wrapper (mirrors the PyTorch SynchronizationBlock forward).
# ----------------------------------------------------------------------------
class SynchronizationBlock:
    def __init__(self, sensors, num_channels, c_sync, L_common,
                 synchronization_method, window_lengths,
                 compute_dtype=jnp.float32,      # f32 default for torch parity;
                                                 # pass jnp.bfloat16 for MXU speed.
                 out_dtype=jnp.float32,          # bf16 halves the output HBM stream.
                 max_batch_tile=128,
                 vmem_budget_bytes=24 * 1024 * 1024,   # fits v7x (64 MiB phys)
                 vmem_limit_bytes=32 * 1024 * 1024):
        self.sensors = list(sensors)
        self.num_channels = dict(num_channels)
        self.total_channels = sum(self.num_channels[s] for s in self.sensors)
        self.c_sync = c_sync  # only used by sync_head_conv (not implemented here)
        self.L_common = int(L_common)
        # Lane-dense output: pad the synchronized length to a 128 multiple so all
        # output stores are unmasked; the wrapper slices back to L_common.
        self.L_out_pad = _round_up(self.L_common, 128)
        self.window_lengths = dict(window_lengths)
        self.synchronization_method = synchronization_method
        self.compute_dtype = compute_dtype
        self.out_dtype = out_dtype
        self.max_batch_tile = int(max_batch_tile)
        self.vmem_budget_bytes = int(vmem_budget_bytes)
        self.vmem_limit_bytes = int(vmem_limit_bytes)

        c_sizes = [self.num_channels[s] for s in self.sensors]
        offsets = [0] + list(accumulate(c_sizes))[:-1]
        lengths = [self.window_lengths[s] for s in self.sensors]

        if synchronization_method == "resample_linear":
            l_effs = list(lengths)                               # every sample contributes
        elif synchronization_method == "zeropad":
            l_effs = [min(l, self.L_out_pad) for l in lengths]   # never DMA discarded tail
        else:
            # TODO(synk): sync_head_conv / sync_head_fc / resample_fft /
            # resample_spline not reproducible without synchronization_utils /
            # FFT / scipy spline equivalents.
            raise ValueError(
                f"Unsupported synchronization_method: {synchronization_method}")

        self.sensor_meta = tuple(zip(offsets, c_sizes, lengths, l_effs))

        if synchronization_method == "resample_linear":
            self.resample_mats = [
                jnp.asarray(
                    _linear_interp_matrix(self.window_lengths[s], self.L_common,
                                          self.L_out_pad),
                    dtype=self.compute_dtype)
                for s in self.sensors]
        else:
            self.resample_mats = None

    # ------------------------------------------------------------------
    def _pick_batch_tile(self, B):
        """VMEM-budgeted batch tile.  3-D sensor blocks have no sublane-alignment
        constraint (last two dims equal the full array dims), so any tile is
        legal; we cap it so double-buffered blocks + resident matrices fit the
        budget, and keep the grid >= 2 steps for pipelining / megacore."""
        out_b = jnp.dtype(self.out_dtype).itemsize
        # Per batch element: f32 inputs (x2 for cast/reshape intermediates) plus
        # output block store + f32 accumulator intermediate.
        per_b = (2 * sum(c * le * 4 for (_, c, _l, le) in self.sensor_meta)
                 + self.total_channels * self.L_out_pad * (4 + out_b))
        mat_bytes = 0
        if self.synchronization_method == "resample_linear":
            cb = jnp.dtype(self.compute_dtype).itemsize
            # TODO(synk): single-buffer the resident matrices (pl.Buffered(1)) /
            # add a K grid axis for very long windows; for now count x2.
            mat_bytes = 2 * sum(l * self.L_out_pad * cb
                                for (_, _c, l, _le) in self.sensor_meta)
        tb = max(1, (self.vmem_budget_bytes - mat_bytes) // max(1, 2 * per_b))
        tb = min(tb, B, self.max_batch_tile)
        if B >= 2:
            tb = min(tb, max(1, B // 2))   # >= 2 grid steps (pipelining, 2 TCs on v7x)
        # Prefer a divisor of B near tb (avoids a ragged final tile); ragged
        # tiles are still correct (row-independent compute + masked final store).
        for d in range(tb, max(0, tb // 2), -1):
            if B % d == 0:
                return d
        return tb

    # ------------------------------------------------------------------
    def __call__(self, input_data_list):
        """
        input_data_list: list of (B, C_sensor, L_sensor) arrays, one per sensor,
                         in self.sensors order.
        returns: (B, C_total, L_common) in out_dtype (== torch.cat(..., dim=1)).
        """
        assert len(input_data_list) == len(self.sensors)
        B = int(input_data_list[0].shape[0])
        for inp, (_, c_s, l_s, _) in zip(input_data_list, self.sensor_meta):
            assert tuple(inp.shape) == (B, c_s, l_s)

        tb = self._pick_batch_tile(B)
        grid = (pl.cdiv(B, tb),)

        args, in_specs = [], []
        flops = 0
        bytes_accessed = (B * self.total_channels * self.L_out_pad
                          * jnp.dtype(self.out_dtype).itemsize)

        if self.synchronization_method == "resample_linear":
            for inp, (_, c_s, l_s, _) in zip(input_data_list, self.sensor_meta):
                args.append(inp)   # no wrapper cast: DMA HBM dtype, cast in-kernel
                in_specs.append(pl.BlockSpec((tb, c_s, l_s), lambda i: (i, 0, 0)))
                bytes_accessed += B * c_s * l_s * inp.dtype.itemsize
                flops += 2 * B * c_s * l_s * self.L_out_pad
            for mat, (_, _c_s, l_s, _) in zip(self.resample_mats, self.sensor_meta):
                args.append(mat)
                # Constant index_map -> matrix stays VMEM-resident across the grid.
                in_specs.append(pl.BlockSpec((l_s, self.L_out_pad),
                                             lambda i: (0, 0)))
                bytes_accessed += l_s * self.L_out_pad * mat.dtype.itemsize
            kernel = _make_linear_kernel(self.sensor_meta, self.L_out_pad, tb,
                                         self.compute_dtype)
        else:  # zeropad: pure copy, no matrices, no MXU.
            for inp, (_, c_s, _l_s, l_eff) in zip(input_data_list, self.sensor_meta):
                args.append(inp)
                # Truncate case: block last dim = L_out_pad (a 128 multiple), so
                # the discarded tail is never DMA'd from HBM.
                in_specs.append(pl.BlockSpec((tb, c_s, l_eff), lambda i: (i, 0, 0)))
                bytes_accessed += B * c_s * l_eff * inp.dtype.itemsize
            kernel = _make_zeropad_kernel(self.sensor_meta, self.L_out_pad)

        out_spec = pl.BlockSpec((tb, self.total_channels, self.L_out_pad),
                                lambda i: (i, 0, 0))

        out = pl.pallas_call(
            kernel,
            out_shape=jax.ShapeDtypeStruct(
                (B, self.total_channels, self.L_out_pad), self.out_dtype),
            grid_spec=pl.GridSpec(grid=grid, in_specs=in_specs,
                                  out_specs=out_spec),
            compiler_params=pltpu.CompilerParams(
                dimension_semantics=("parallel",),
                vmem_limit_bytes=self.vmem_limit_bytes),
            cost_estimate=pl.CostEstimate(flops=int(flops), transcendentals=0,
                                          bytes_accessed=int(bytes_accessed)),
        )(*args)

        if self.L_out_pad != self.L_common:
            out = out[:, :, :self.L_common]   # drop lane padding
        return out


# ----------------------------------------------------------------------------
if __name__ == "__main__":
    key = jax.random.PRNGKey(0)
    B = 2
    sensors = ["imu", "emg"]
    num_channels = {"imu": 4, "emg": 6}
    window_lengths = {"imu": 32, "emg": 24}
    L_common = 16
    C_total = sum(num_channels.values())

    k1, k2 = jax.random.split(key)
    x_imu = jax.random.normal(k1, (B, num_channels["imu"], window_lengths["imu"]),
                              dtype=jnp.float32)
    x_emg = jax.random.normal(k2, (B, num_channels["emg"], window_lengths["emg"]),
                              dtype=jnp.float32)
    inputs = [x_imu, x_emg]

    # ---------------- resample_linear ----------------
    block_lin = SynchronizationBlock(
        sensors, num_channels, c_sync=1, L_common=L_common,
        synchronization_method="resample_linear", window_lengths=window_lengths)
    out_lin = jax.block_until_ready(block_lin(inputs))
    assert out_lin.shape == (B, C_total, L_common)
    assert out_lin.dtype == jnp.float32

    # Independent gather+lerp reference (== F.interpolate linear, align_corners=False).
    def ref_linear(x, l_out):
        xn = np.asarray(x, dtype=np.float64)
        _, _, L = xn.shape
        j = np.arange(l_out)
        src = (L / l_out) * (j + 0.5) - 0.5
        src = np.maximum(src, 0.0)
        i0 = np.minimum(np.floor(src).astype(np.int64), L - 1)
        i1 = np.minimum(i0 + 1, L - 1)
        w1 = np.clip(src - i0, 0.0, 1.0)
        return xn[:, :, i0] * (1.0 - w1) + xn[:, :, i1] * w1

    ref_lin = np.concatenate([ref_linear(x_imu, L_common),
                              ref_linear(x_emg, L_common)], axis=1)
    # Tolerance covers the TPU's default f32-matmul precision path.
    np.testing.assert_allclose(np.asarray(out_lin, dtype=np.float64), ref_lin,
                               rtol=2e-2, atol=2e-2)

    # ---------------- zeropad (truncate case: L_sensor > L_common) ----------------
    block_zp = SynchronizationBlock(
        sensors, num_channels, c_sync=1, L_common=L_common,
        synchronization_method="zeropad", window_lengths=window_lengths)
    out_zp = jax.block_until_ready(block_zp(inputs))
    assert out_zp.shape == (B, C_total, L_common)
    np.testing.assert_allclose(np.asarray(out_zp[:, :num_channels["imu"], :]),
                               np.asarray(x_imu[:, :, :L_common]),
                               rtol=1e-6, atol=1e-6)
    np.testing.assert_allclose(np.asarray(out_zp[:, num_channels["imu"]:, :]),
                               np.asarray(x_emg[:, :, :L_common]),
                               rtol=1e-6, atol=1e-6)

    # ---------------- zeropad (pad case: L_common > every L_sensor) ----------------
    L_pad = 40
    block_zp2 = SynchronizationBlock(
        sensors, num_channels, c_sync=1, L_common=L_pad,
        synchronization_method="zeropad", window_lengths=window_lengths)
    out_zp2 = jax.block_until_ready(block_zp2(inputs))
    ref_zp2 = np.zeros((B, C_total, L_pad), dtype=np.float32)
    ref_zp2[:, :num_channels["imu"], :window_lengths["imu"]] = np.asarray(x_imu)
    ref_zp2[:, num_channels["imu"]:, :window_lengths["emg"]] = np.asarray(x_emg)
    np.testing.assert_allclose(np.asarray(out_zp2), ref_zp2, rtol=1e-6, atol=1e-6)

    print("KERNEL_OK")
</pallas_src>

<mosaic_0001>
module attributes {stable_mosaic.version = 11 : i64} {
  func.func @kernel(%arg0: i32, %arg1: memref<1x4x32xf32, #tpu.memory_space<vmem>>, %arg2: memref<1x6x24xf32, #tpu.memory_space<vmem>>, %arg3: memref<32x128xf32, #tpu.memory_space<vmem>>, %arg4: memref<24x128xf32, #tpu.memory_space<vmem>>, %arg5: memref<1x10x128xf32, #tpu.memory_space<vmem>>) attributes {dimension_semantics = [#tpu.dimension_semantics<parallel>], iteration_bounds = array<i64: 2>, scalar_prefetch = 0 : i64, scratch_operands = 0 : i64, tpu.core_type = #tpu.core_type<tc>, window_params = [{transform_indices = @transform_0, window_bounds = array<i64: 1, 4, 32>}, {transform_indices = @transform_1, window_bounds = array<i64: 1, 6, 24>}, {pipeline_mode = #tpu.pipeline_mode<synchronous>, transform_indices = @transform_2, window_bounds = array<i64: 32, 128>}, {pipeline_mode = #tpu.pipeline_mode<synchronous>, transform_indices = @transform_3, window_bounds = array<i64: 24, 128>}, {transform_indices = @transform_4, window_bounds = array<i64: 1, 10, 128>}]} {
    %c0 = arith.constant 0 : index
    %c0_0 = arith.constant 0 : index
    %c0_1 = arith.constant 0 : index
    %0 = vector.load %arg1[%c0, %c0_0, %c0_1] : memref<1x4x32xf32, #tpu.memory_space<vmem>>, vector<1x4x32xf32>
    %1 = vector.shape_cast %0 : vector<1x4x32xf32> to vector<4x32xf32>
    %c0_2 = arith.constant 0 : index
    %c0_3 = arith.constant 0 : index
    %2 = vector.load %arg3[%c0_2, %c0_3] : memref<32x128xf32, #tpu.memory_space<vmem>>, vector<32x128xf32>
    %cst = arith.constant dense<0.000000e+00> : vector<4x128xf32>
    %3 = tpu.matmul %1, %2, %cst {dimension_numbers = #tpu.dot_dimension_numbers<[1], [0], [0], [1], [0, 0, 1, 1], [], []>} : vector<4x32xf32>, vector<32x128xf32>, vector<4x128xf32> -> vector<4x128xf32>
    %4 = vector.shape_cast %3 : vector<4x128xf32> to vector<1x4x128xf32>
    %c0_4 = arith.constant 0 : index
    %c0_5 = arith.constant 0 : index
    %c0_6 = arith.constant 0 : index
    %5 = vector.load %arg5[%c0_4, %c0_5, %c0_6] : memref<1x10x128xf32, #tpu.memory_space<vmem>>, vector<1x4x128xf32>
    tpu.vector_store %arg5[%c0_4, %c0_5, %c0_6], %4 {strides = array<i32>} : memref<1x10x128xf32, #tpu.memory_space<vmem>>, vector<1x4x128xf32>,
    %c0_7 = arith.constant 0 : index
    %c0_8 = arith.constant 0 : index
    %c0_9 = arith.constant 0 : index
    %6 = vector.load %arg2[%c0_7, %c0_8, %c0_9] : memref<1x6x24xf32, #tpu.memory_space<vmem>>, vector<1x6x24xf32>
    %7 = vector.shape_cast %6 : vector<1x6x24xf32> to vector<6x24xf32>
    %c0_10 = arith.constant 0 : index
    %c0_11 = arith.constant 0 : index
    %8 = vector.load %arg4[%c0_10, %c0_11] : memref<24x128xf32, #tpu.memory_space<vmem>>, vector<24x128xf32>
    %cst_12 = arith.constant dense<0.000000e+00> : vector<6x128xf32>
    %9 = tpu.matmul %7, %8, %cst_12 {dimension_numbers = #tpu.dot_dimension_numbers<[1], [0], [0], [1], [0, 0, 1, 1], [], []>} : vector<6x24xf32>, vector<24x128xf32>, vector<6x128xf32> -> vector<6x128xf32>
    %10 = vector.shape_cast %9 : vector<6x128xf32> to vector<1x6x128xf32>
    %c0_13 = arith.constant 0 : index
    %c4 = arith.constant 4 : index
    %c0_14 = arith.constant 0 : index
    %11 = vector.load %arg5[%c0_13, %c4, %c0_14] : memref<1x10x128xf32, #tpu.memory_space<vmem>>, vector<1x6x128xf32>
    tpu.vector_store %arg5[%c0_13, %c4, %c0_14], %10 {strides = array<i32>} : memref<1x10x128xf32, #tpu.memory_space<vmem>>, vector<1x6x128xf32>,
    return
  }
  func.func @transform_0(%arg0: i32) -> (i32, i32, i32) {
    %c0_i32 = arith.constant 0 : i32
    %c0_i32_0 = arith.constant 0 : i32
    %c0_i32_1 = arith.constant 0 : i32
    return %arg0, %c0_i32, %c0_i32_0 : i32, i32, i32
  }
  func.func @transform_1(%arg0: i32) -> (i32, i32, i32) {
    %c0_i32 = arith.constant 0 : i32
    %c0_i32_0 = arith.constant 0 : i32
    %c0_i32_1 = arith.constant 0 : i32
    return %arg0, %c0_i32, %c0_i32_0 : i32, i32, i32
  }
  func.func @transform_2(%arg0: i32) -> (i32, i32) {
    %c0_i32 = arith.constant 0 : i32
    %c0_i32_0 = arith.constant 0 : i32
    %c0_i32_1 = arith.constant 0 : i32
    return %c0_i32, %c0_i32_0 : i32, i32
  }
  func.func @transform_3(%arg0: i32) -> (i32, i32) {
    %c0_i32 = arith.constant 0 : i32
    %c0_i32_0 = arith.constant 0 : i32
    %c0_i32_1 = arith.constant 0 : i32
    return %c0_i32, %c0_i32_0 : i32, i32
  }
  func.func @transform_4(%arg0: i32) -> (i32, i32, i32) {
    %c0_i32 = arith.constant 0 : i32
    %c0_i32_0 = arith.constant 0 : i32
    %c0_i32_1 = arith.constant 0 : i32
    return %arg0, %c0_i32, %c0_i32_0 : i32, i32, i32
  }
}

</mosaic_0001>

<llo_original>
// kernel: tpu_custom_call.1
$region0: #{tpu_custom_call.1}
  #allocation0 [shape = 'u32[]', space=smem, size = 0x4, offset = 0x4, fixed_abs, tag = 'smem constant byte address 0x4 - core index']
  #allocation1 [shape = 'u32[72,128]{1,0:T(1,128)}', space=vmem, size = 0x9000, scoped, tag = 'internal scratch']
  %s0 = inlined_call_operand.hbm [shape: f32[2,4,32], index: 0, kind: input, shape index: {}]
  %s1 = inlined_call_operand.vmem [shape: f32[2,6,24], index: 1, kind: input, shape index: {}]
  %s2 = inlined_call_operand.hbm [shape: f32[32,128], index: 2, kind: input, shape index: {}]
  %s3 = inlined_call_operand.vmem [shape: f32[24,128], index: 3, kind: input, shape index: {}]
  %s4 = inlined_call_operand.vmem [shape: f32[2,10,128], index: 4, kind: output, shape index: {}]
  %s5 = sld [smem:[#allocation0]]
  $region57: #{tpu_custom_call.1} parent=0
    _
  %s7 = ssub.s32 1, %s5
  %s8 = scalar_select 0, %s7, %s5
  $region1: #{tpu_custom_call.1} parent=0
    #allocation2 [shape = 'u8[4096]{0}', space=vmem, size = 0x1000, scoped, tag = 'input window, operand 0']
    #allocation3 [shape = 's32[2]{0}', space=sflag, size = 0x8, scoped, tag = 'scoped memory for tpu_custom_call.1']
    #allocation4 [shape = 'u8[16384]{0}', space=vmem, size = 0x4000, scoped, tag = 'input window, operand 2, single buffered']
    #allocation5 [shape = 's32[1]{0}', space=sflag, size = 0x4, scoped, tag = 'scoped memory for tpu_custom_call.1']
    %9 = vsyncpa [#allocation3], 0
    %s10 = scalar_lea.sflag [#allocation3], 1
    %11 = vsyncpa %s10, 0
    %12 = vsyncpa [#allocation5], 0
    loop: start=0, step=1, limit=4
    $region2: #{tpu_custom_call.1} parent=1 // loop_pre_header
      _
    $region3: #{tpu_custom_call.1} parent=1 // loop_header
      %s14 = sphi 0, %s18
      %p15 = scmp.ge.s32.totalorder %s14, 4
      %s24 = sphi 0, %s26
      %s27 = sphi 0, %s24
      %s28 = sphi 0, %s27
      %s44 = sphi 0, %s28
      %s50 = sphi 0, %s52
      %s53 = sphi 0, %s50
      %s54 = sphi 0, %s53
      %s70 = sphi 0, %s54
      %s74 = sphi 0, %s74
      %s76 = sphi 0, %s74
      %s77 = sphi 0, %s76
      %s91 = sphi 0, %s77
      %s95 = sphi 0, %s95
      %s97 = sphi 0, %s95
      %s98 = sphi 0, %s97
      %s112 = sphi 0, %s98
      %s118 = sphi 0, %s120
      %s121 = sphi 0, %s118
      %s122 = sphi 0, %s121
      %s138 = sphi 0, %s122
    $region4: #{tpu_custom_call.1} parent=1 // loop_header_branch
      %17 = sbr.rel (%p15) target = $region8
    $region5: #{tpu_custom_call.1} parent=1 // loop_body
      %s19 = ssub.s32 %s14, 1
      %s20 = ssub.s32 %s14, 2
      %s21 = sadd.s32 %s14, 1
      %s22 = ssub.s32 %s14, %s21
      %p23 = scmp.eq.s32.totalorder %s22, 0
      %s25 = sadd.s32 %s24, 1
      %s26 = scalar_select %p23, %s24, %s25
      %p29 = pneg %p23
      %p30 = scmp.eq.s32.totalorder %s14, 1
      %p31 = por %p29, %p30
      %p32 = scmp.ne.s32.totalorder %s24, %s27
      %p33 = scmp.eq.s32.totalorder %s14, 0
      %p34 = por %p32, %p33
      %p35 = scmp.ne.s32.totalorder %s24, %s27
      %p36 = scmp.eq.s32.totalorder %s19, 1
      %p37 = por %p35, %p36
      %p38 = scmp.ne.s32.totalorder %s27, %s28
      %p39 = scmp.eq.s32.totalorder %s19, 0
      %p40 = por %p38, %p39
      %p41 = scmp.ne.s32.totalorder %s27, %s28
      %p42 = scmp.eq.s32.totalorder %s20, 1
      %p43 = por %p41, %p42
      %p45 = scmp.ne.s32.totalorder %s28, %s44
      %p46 = scmp.eq.s32.totalorder %s20, 0
      %p47 = por %p45, %p46
      %s48 = ssub.s32 %s14, %s21
      %p49 = scmp.eq.s32.totalorder %s48, 0
      %s51 = sadd.s32 %s50, 1
      %s52 = scalar_select %p49, %s50, %s51
      %p55 = pneg %p49
      %p56 = scmp.eq.s32.totalorder %s14, 1
      %p57 = por %p55, %p56
      %p58 = scmp.ne.s32.totalorder %s50, %s53
      %p59 = scmp.eq.s32.totalorder %s14, 0
      %p60 = por %p58, %p59
      %p61 = scmp.ne.s32.totalorder %s50, %s53
      %p62 = scmp.eq.s32.totalorder %s19, 1
      %p63 = por %p61, %p62
      %p64 = scmp.ne.s32.totalorder %s53, %s54
      %p65 = scmp.eq.s32.totalorder %s19, 0
      %p66 = por %p64, %p65
      %p67 = scmp.ne.s32.totalorder %s53, %s54
      %p68 = scmp.eq.s32.totalorder %s20, 1
      %p69 = por %p67, %p68
      %p71 = scmp.ne.s32.totalorder %s54, %s70
      %p72 = scmp.eq.s32.totalorder %s20, 0
      %p73 = por %p71, %p72
      %s75 = sadd.s32 %s74, 1
      %p78 = scmp.eq.s32.totalorder %s14, 1
      %p79 = scmp.ne.s32.totalorder %s74, %s76
      %p80 = scmp.eq.s32.totalorder %s14, 0
      %p81 = por %p79, %p80
      %p82 = scmp.ne.s32.totalorder %s74, %s76
      %p83 = scmp.eq.s32.totalorder %s19, 1
      %p84 = por %p82, %p83
      %p85 = scmp.ne.s32.totalorder %s76, %s77
      %p86 = scmp.eq.s32.totalorder %s19, 0
      %p87 = por %p85, %p86
      %p88 = scmp.ne.s32.totalorder %s76, %s77
      %p89 = scmp.eq.s32.totalorder %s20, 1
      %p90 = por %p88, %p89
      %p92 = scmp.ne.s32.totalorder %s77, %s91
      %p93 = scmp.eq.s32.totalorder %s20, 0
      %p94 = por %p92, %p93
      %s96 = sadd.s32 %s95, 1
      %p99 = scmp.eq.s32.totalorder %s14, 1
      %p100 = scmp.ne.s32.totalorder %s95, %s97
      %p101 = scmp.eq.s32.totalorder %s14, 0
      %p102 = por %p100, %p101
      %p103 = scmp.ne.s32.totalorder %s95, %s97
      %p104 = scmp.eq.s32.totalorder %s19, 1
      %p105 = por %p103, %p104
      %p106 = scmp.ne.s32.totalorder %s97, %s98
      %p107 = scmp.eq.s32.totalorder %s19, 0
      %p108 = por %p106, %p107
      %p109 = scmp.ne.s32.totalorder %s97, %s98
      %p110 = scmp.eq.s32.totalorder %s20, 1
      %p111 = por %p109, %p110
      %p113 = scmp.ne.s32.totalorder %s98, %s112
      %p114 = scmp.eq.s32.totalorder %s20, 0
      %p115 = por %p113, %p114
      %s116 = ssub.s32 %s14, %s21
      %p117 = scmp.eq.s32.totalorder %s116, 0
      %s119 = sadd.s32 %s118, 1
      %s120 = scalar_select %p117, %s118, %s119
      %p123 = pneg %p117
      %p124 = scmp.eq.s32.totalorder %s14, 1
      %p125 = por %p123, %p124
      %p126 = scmp.ne.s32.totalorder %s118, %s121
      %p127 = scmp.eq.s32.totalorder %s14, 0
      %p128 = por %p126, %p127
      %p129 = scmp.ne.s32.totalorder %s118, %s121
      %p130 = scmp.eq.s32.totalorder %s19, 1
      %p131 = por %p129, %p130
      %p132 = scmp.ne.s32.totalorder %s121, %s122
      %p133 = scmp.eq.s32.totalorder %s19, 0
      %p134 = por %p132, %p133
      %p135 = scmp.ne.s32.totalorder %s121, %s122
      %p136 = scmp.eq.s32.totalorder %s20, 1
      %p137 = por %p135, %p136
      %p139 = scmp.ne.s32.totalorder %s122, %s138
      %p140 = scmp.eq.s32.totalorder %s20, 0
      %p141 = por %p139, %p140
      %p142 = scmp.le.s32.totalorder 1, %s14
      %p143 = scmp.lt.s32.totalorder %s14, 3
      %p144 = pnand %p142, %p143
      %p145 = pneg %p144
      // Predicated region
      $region9: #{tpu_custom_call.1} parent=5 // pred_check
        _
      $region10: #{tpu_custom_call.1} parent=5 // pred_check_branch
        %147 = sbr.rel (%p144) target = $region12
      $region11: #{tpu_custom_call.1} parent=5 // pred_region
        %s148 = ssub.s32 %s14, 1
        // Predicated region
        $region13: #{tpu_custom_call.1} parent=11 // pred_check
          %p149 = pneg %p87
        $region14: #{tpu_custom_call.1} parent=11 // pred_check_branch
          %151 = sbr.rel (%p149) target = $region16
        $region15: #{tpu_custom_call.1} parent=11 // pred_region
          %153 = vsyncadd [#allocation5], 0
          %s154 = sshll.u32 %s2, 4
          %s155 = int_to_ptr.hbm [resolvable:$true] %s154
          %s156 = sshll.u32 [#allocation4], 4
          %s157 = int_to_ptr.vmem [resolvable:$true] %s156
          %162 = dma.hbm_to_vmem [thread:$0]  %s155, 512, %s157, [#allocation5], 128, 128, 8
        $region16: #{tpu_custom_call.1} parent=11 // pred_fallthru
          _
        // Predicated region
        $region17: #{tpu_custom_call.1} parent=11 // pred_check
          %p163 = pneg %p108
        $region18: #{tpu_custom_call.1} parent=11 // pred_check_branch
          %165 = sbr.rel (%p163) target = $region20
        $region19: #{tpu_custom_call.1} parent=11 // pred_region
          _
        $region20: #{tpu_custom_call.1} parent=11 // pred_fallthru
          _
      $region12: #{tpu_custom_call.1} parent=5 // pred_fallthru
        _
      %p166 = scmp.lt.s32.totalorder %s14, 2
      // Predicated region
      $region21: #{tpu_custom_call.1} parent=5 // pred_check
        %p167 = pneg %p166
      $region22: #{tpu_custom_call.1} parent=5 // pred_check_branch
        %169 = sbr.rel (%p167) target = $region24
      $region23: #{tpu_custom_call.1} parent=5 // pred_region
        // Predicated region
        $region25: #{tpu_custom_call.1} parent=23 // pred_check
          %p170 = pneg %p34
        $region26: #{tpu_custom_call.1} parent=23 // pred_check_branch
          %172 = sbr.rel (%p170) target = $region28
        $region27: #{tpu_custom_call.1} parent=23 // pred_region
          %s173 = sand.u32 %s24, 1
          %s174 = scalar_lea.sflag [#allocation3], %s173
          %s175 = sand.u32 %s24, 1
          %s176 = smul.addr %s175, 4
          %s177 = scalar_lea.vmem [#allocation2], %s176
          %179 = vsyncadd %s174, 0
          %s180 = smul.addr %s14, 4
          %s181 = scalar_lea.hbm %s0, %s180
          %s183 = sshll.u32 %s181, 4
          %s184 = int_to_ptr.hbm [resolvable:$true] %s183
          %s185 = sshll.u32 %s177, 4
          %s186 = int_to_ptr.vmem [resolvable:$true] %s185
          %188 = dma.hbm_to_vmem [thread:$0]  %s184, 64, %s186, %s174
        $region28: #{tpu_custom_call.1} parent=23 // pred_fallthru
          _
        // Predicated region
        $region29: #{tpu_custom_call.1} parent=23 // pred_check
          %p189 = pneg %p60
        $region30: #{tpu_custom_call.1} parent=23 // pred_check_branch
          %191 = sbr.rel (%p189) target = $region32
        $region31: #{tpu_custom_call.1} parent=23 // pred_region
          %p192 = scmp.lt.s32.totalorder %s14, 1
          %s193 = scalar_select %p192, %s14, 1
          %s194 = smul.addr %s193, 8
          %s195 = scalar_lea.vmem %s1, %s194
        $region32: #{tpu_custom_call.1} parent=23 // pred_fallthru
          _
      $region24: #{tpu_custom_call.1} parent=5 // pred_fallthru
        _
      %p196 = scmp.le.s32.totalorder 1, %s14
      %p197 = scmp.lt.s32.totalorder %s14, 3
      %p198 = pnand %p196, %p197
      %p199 = pneg %p198
      // Predicated region
      $region33: #{tpu_custom_call.1} parent=5 // pred_check
        _
      $region34: #{tpu_custom_call.1} parent=5 // pred_check_branch
        %201 = sbr.rel (%p198) target = $region36
      $region35: #{tpu_custom_call.1} parent=5 // pred_region
        %s202 = ssub.s32 %s14, 1
        %s203 = sand.u32 %s27, 1
        %s204 = scalar_lea.sflag [#allocation3], %s203
        %s205 = sand.u32 %s27, 1
        %s206 = smul.addr %s205, 4
        %s207 = scalar_lea.vmem [#allocation2], %s206
        // Predicated region
        $region37: #{tpu_custom_call.1} parent=35 // pred_check
          %p208 = pneg %p40
        $region38: #{tpu_custom_call.1} parent=35 // pred_check_branch
          %210 = sbr.rel (%p208) target = $region40
        $region39: #{tpu_custom_call.1} parent=35 // pred_region
          %212 = dma.done %s204, 64
        $region40: #{tpu_custom_call.1} parent=35 // pred_fallthru
          _
        // Predicated region
        $region41: #{tpu_custom_call.1} parent=35 // pred_check
          %p213 = pneg %p87
        $region42: #{tpu_custom_call.1} parent=35 // pred_check_branch
          %215 = sbr.rel (%p213) target = $region44
        $region43: #{tpu_custom_call.1} parent=35 // pred_region
          %217 = dma.done [#allocation5], 512
        $region44: #{tpu_custom_call.1} parent=35 // pred_fallthru
          _
        %s218 = sand.u32 %s27, 1
        %s219 = scalar_lea.sflag [#allocation3], %s218
        %s220 = sand.u32 %s27, 1
        %s221 = smul.addr %s220, 4
        %s222 = scalar_lea.vmem [#allocation2], %s221
        %p223 = pneg %p40
        %p224 = pneg %p37
        %p225 = scmp.lt.s32.totalorder %s19, 1
        %s226 = scalar_select %p225, %s19, 1
        %s227 = smul.addr %s226, 8
        %s228 = scalar_lea.vmem %s1, %s227
        %p229 = pneg %p66
        %p230 = pneg %p63
        %p231 = pneg %p87
        %p232 = pneg %p84
        %p233 = pneg %p108
        %p234 = pneg %p105
        %p235 = pneg %p134
        %p236 = pneg %p131
        %p237 = scmp.lt.s32.totalorder %s19, 1
        %s238 = scalar_select %p237, %s19, 1
        %s239 = smul.addr %s238, 2
        %s240 = smul.addr %s239, 8
        %s241 = scalar_lea.vmem %s4, %s240
        %p242 = scmp.lt.s32.totalorder %s19, 1
        %s243 = scalar_select %p242, %s19, 1
        %s244 = smul.addr %s243, 8
        %s245 = scalar_lea.vmem %s1, %s244
        %p246 = scmp.lt.s32.totalorder %s19, 1
        %s247 = scalar_select %p246, %s19, 1
        %s248 = smul.addr %s247, 2
        %s249 = smul.addr %s248, 8
        %s250 = scalar_lea.vmem %s4, %s249
        %v251 = vld [vmem:[%s207] sm:$0xf]
        %v252 = vld [vmem:[#allocation4] sm:$0xff]
        %v253 = vld [vmem:[#allocation4 + $0x8] sm:$0xff]
        %v254 = vld [vmem:[#allocation4 + $0x10] sm:$0xff]
        %v255 = vld [vmem:[#allocation4 + $0x18] sm:$0xff]
        %vm256 = vcmask 261120
        %v258 = vsel %vm256, %v251, 0
        %260 = vmatpush.msra.mxu0 0.0
        %261 = vmatpush.msra.mxu0 0.0
        %262 = vmatpush.msra.mxu0 0.0
        %263 = vmatpush.msra.mxu0 0.0
        %264 = vmatpush.msra.mxu0 0.0
        %265 = vmatpush.msra.mxu0 0.0
        %266 = vmatpush.msra.mxu0 0.0
        %267 = vmatpush.msra.mxu0 0.0
        %268 = vmatpush.msra.mxu0 0.0
        %269 = vmatpush.msra.mxu0 0.0
        %270 = vmatpush.msra.mxu0 0.0
        %271 = vmatpush.msra.mxu0 0.0
        %272 = vmatpush.msra.mxu0 %v255
        %273 = vmatpush.msra.mxu0 %v254
        %274 = vmatpush.msra.mxu0 %v253
        %275 = vmatpush.msra.mxu0 %v252
        %276 = vmatmul.f32.gmra.mxu0 %v258
        %v277 = vpop.f32.mrf.mxu0
        %v278 = vadd.f32 0.0, %v277
        %279 = vdwg.mxu0
        %280 = vst [vmem:[%s250] sm:$0xf] %v278
        %v281 = vld [vmem:[%s245] sm:$0x3f]
        %v282 = vld [vmem:[%s3] sm:$0xff]
        %v283 = vld [vmem:[%s3 + $0x8] sm:$0xff]
        %v284 = vld [vmem:[%s3 + $0x10] sm:$0xff]
        %vm285 = vcmask 195584
        %v287 = vsel %vm285, %v281, 0
        %289 = vmatpush.msra.mxu0 0.0
        %290 = vmatpush.msra.mxu0 0.0
        %291 = vmatpush.msra.mxu0 0.0
        %292 = vmatpush.msra.mxu0 0.0
        %293 = vmatpush.msra.mxu0 0.0
        %294 = vmatpush.msra.mxu0 0.0
        %295 = vmatpush.msra.mxu0 0.0
        %296 = vmatpush.msra.mxu0 0.0
        %297 = vmatpush.msra.mxu0 0.0
        %298 = vmatpush.msra.mxu0 0.0
        %299 = vmatpush.msra.mxu0 0.0
        %300 = vmatpush.msra.mxu0 0.0
        %301 = vmatpush.msra.mxu0 0.0
        %302 = vmatpush.msra.mxu0 %v284
        %303 = vmatpush.msra.mxu0 %v283
        %304 = vmatpush.msra.mxu0 %v282
        %305 = vmatmul.f32.gmra.mxu0 %v287
        %v306 = vpop.f32.mrf.mxu0
        %v307 = vadd.f32 0.0, %v306
        %308 = vdwg.mxu0
        %309 = vst [vmem:[%s250 + $0x4] sm:$0x3f] %v307
        %p310 = scmp.lt.s32.totalorder %s19, 1
        %s311 = scalar_select %p310, %s19, 1
        %s312 = smul.addr %s311, 2
        %s313 = smul.addr %s312, 8
        %s314 = scalar_lea.vmem %s4, %s313
        // Predicated region
        $region45: #{tpu_custom_call.1} parent=35 // pred_check
          %p315 = pneg %p131
        $region46: #{tpu_custom_call.1} parent=35 // pred_check_branch
          %317 = sbr.rel (%p315) target = $region48
        $region47: #{tpu_custom_call.1} parent=35 // pred_region
          _
        $region48: #{tpu_custom_call.1} parent=35 // pred_fallthru
          _
      $region36: #{tpu_custom_call.1} parent=5 // pred_fallthru
        _
      %p318 = scmp.le.s32.totalorder 2, %s14
      // Predicated region
      $region49: #{tpu_custom_call.1} parent=5 // pred_check
        %p319 = pneg %p318
      $region50: #{tpu_custom_call.1} parent=5 // pred_check_branch
        %321 = sbr.rel (%p319) target = $region52
      $region51: #{tpu_custom_call.1} parent=5 // pred_region
        %s322 = ssub.s32 %s14, 2
        // Predicated region
        $region53: #{tpu_custom_call.1} parent=51 // pred_check
          %p323 = pneg %p137
        $region54: #{tpu_custom_call.1} parent=51 // pred_check_branch
          %325 = sbr.rel (%p323) target = $region56
        $region55: #{tpu_custom_call.1} parent=51 // pred_region
          %p326 = scmp.lt.s32.totalorder %s20, 1
          %s327 = scalar_select %p326, %s20, 1
          %s328 = smul.addr %s327, 2
          %s329 = smul.addr %s328, 8
          %s330 = scalar_lea.vmem %s4, %s329
        $region56: #{tpu_custom_call.1} parent=51 // pred_fallthru
          _
      $region52: #{tpu_custom_call.1} parent=5 // pred_fallthru
        _
    $region6: #{tpu_custom_call.1} parent=1 // loop_footer
      %s18 = sadd.s32 1, %s14
    $region7: #{tpu_custom_call.1} parent=1 // loop_footer_branch
      %13 = sbr.rel target = $region3
    $region8: #{tpu_custom_call.1} parent=1 // loop_exit
      _
    %331 = vsyncpa [#allocation3], 1
    %s332 = scalar_lea.sflag [#allocation3], 1
    %333 = vsyncpa %s332, 1
    %334 = vsyncpa [#allocation5], 1

</llo_original>
